<compile_context>
chip_gen: v7x
topology: tpu7x:2x2x1
jax: 0.10.0
libtpu: 0.0.40
codegen_flags: <defaults>
</compile_context>

<pallas_src>
import functools

import jax
import jax.numpy as jnp
from jax.experimental import pallas as pl
from jax.experimental.pallas import tpu as pltpu

_LANE = 128
_SUBLANE = 8


def _round_up(n, m):
    return ((n + m - 1) // m) * m


def _fused_meta_splitting_kernel(*refs, layout):
    """refs = (x, alpha_rep, [w, b] * L, out). Everything lives in VMEM.

    layout: tuple of (num_copies, dout_pad) per layer (static).
    x:         [Bp, din_pad_0]                       f32
    alpha_rep: [Bp, sum_l C_l * dout_pad_l]          f32 (per-copy alpha, lane-replicated)
    w_l:       [din_pad_l, C_l * dout_pad_l]         bf16 (copies packed lane-densely)
    b_l:       [1, C_l * dout_pad_l]                 f32
    """
    num_layers = len(layout)
    x_ref, a_ref = refs[0], refs[1]
    out_ref = refs[2 + 2 * num_layers]

    x = x_ref[...]            # [Bp, din_pad_0] f32 (padded lanes are exactly 0)
    alpha = a_ref[...]        # [Bp, total_alpha_lanes] f32

    a_off = 0
    for layer, (n_copies, dout_pad) in enumerate(layout):
        w_ref = refs[2 + 2 * layer]
        b_ref = refs[3 + 2 * layer]

        # One wide, lane-dense MXU matmul covers all copies of this layer.
        # bf16 operands, f32 accumulation.
        h = jnp.dot(x.astype(w_ref.dtype), w_ref[...],
                    preferred_element_type=jnp.float32)
        h = h + b_ref[...]
        if layer < num_layers - 1:            # last layer: Linear only
            h = jnp.tanh(h)

        # Weighted sum over copies. alpha is already replicated across each
        # copy's 128-lane chunk, so this is aligned 128-lane VPU mul/add only.
        acc = alpha[:, a_off:a_off + dout_pad] * h[:, 0:dout_pad]
        for c in range(1, n_copies):
            lo = c * dout_pad
            acc = acc + alpha[:, a_off + lo:a_off + lo + dout_pad] * h[:, lo:lo + dout_pad]
        x = acc                                # padded lanes stay exactly 0 (tanh(0)=0)
        a_off += n_copies * dout_pad

    out_ref[...] = x                           # lane-dense store


def pack_params(params, weight_dtype=jnp.bfloat16):
    """Pack weights ONCE (layout plumbing, not per-call work).

    w: [C, Din, Dout] -> [din_pad, C * dout_pad]  (zero-padded, copies along lanes, bf16)
    b: [C, 1, Dout]   -> [1, C * dout_pad]        (f32)
    alpha kept as [C, T] f32; gathered per call in the wrapper.
    Returns (packed_arrays, static_meta).
    """
    weights, biases, alphas = params["weights"], params["biases"], params["alpha"]
    num_layers = len(weights)
    packed = {"w": [], "b": [], "alpha": []}
    layout = []
    for layer in range(num_layers):
        w, b = weights[layer], biases[layer]
        c, d_in, d_out = (int(s) for s in w.shape)
        din_pad = _round_up(d_in, _LANE)
        dout_pad = _round_up(d_out, _LANE)
        w_pad = jnp.zeros((din_pad, c * dout_pad), weight_dtype)
        b_pad = jnp.zeros((1, c * dout_pad), jnp.float32)
        for i in range(c):
            w_pad = w_pad.at[:d_in, i * dout_pad:i * dout_pad + d_out].set(
                w[i].astype(weight_dtype))
            b_pad = b_pad.at[:, i * dout_pad:i * dout_pad + d_out].set(
                b[i].reshape(1, d_out).astype(jnp.float32))
        packed["w"].append(w_pad)
        packed["b"].append(b_pad)
        packed["alpha"].append(alphas[layer].astype(jnp.float32))
        layout.append((c, d_out, dout_pad))

    meta = (int(weights[0].shape[1]),        # input_size
            int(weights[-1].shape[2]),       # output_size
            int(alphas[0].shape[1]),         # num_test_tasks
            tuple(layout))
    return packed, meta


def meta_splitting_forward(packed, inputs, task_indices, *, meta):
    """Forward pass of MetaSplittingNetwork as a single fused Pallas kernel.

    `packed` comes from pack_params (call it once; do NOT repack per call).
    Intended to be wrapped in jax.jit so the tiny gather/pad ops fuse with
    the pallas_call in one executable.
    """
    input_size, output_size, num_test_tasks, layout = meta
    num_layers = len(layout)
    batch = inputs.shape[0]
    b_pad = _round_up(batch, _SUBLANE)
    din_pad0 = packed["w"][0].shape[0]

    # Lane-dense, zero-padded activation input.
    x_pad = jnp.zeros((b_pad, din_pad0), jnp.float32)
    x_pad = x_pad.at[:batch, :input_size].set(inputs.astype(jnp.float32))

    # Per-call alpha gather (exact f32), replicated across each copy's lane
    # chunk so the kernel's copy reduction is aligned 128-lane VPU work.
    tid = jnp.zeros((b_pad,), jnp.int32).at[:batch].set(task_indices.astype(jnp.int32))
    tid = jnp.clip(tid, 0, num_test_tasks - 1)   # guard out-of-range task indices
    reps = []
    for layer, (c, _d_out, dout_pad) in enumerate(layout):
        sel = jnp.take(packed["alpha"][layer], tid, axis=1).T          # [Bp, C]
        reps.append(jnp.broadcast_to(sel[:, :, None],
                                     (b_pad, c, dout_pad)).reshape(b_pad, c * dout_pad))
    alpha_rep = jnp.concatenate(reps, axis=1)                          # [Bp, sum C_l*dout_pad_l]

    flat = [x_pad, alpha_rep]
    for layer in range(num_layers):
        flat.append(packed["w"][layer])
        flat.append(packed["b"][layer])

    out_width = layout[-1][2]
    total_bytes = sum(int(a.size) * a.dtype.itemsize for a in flat) + b_pad * out_width * 4
    vmem_limit = int(min(64 * 1024 * 1024, 2 * total_bytes + (16 << 20)))

    kernel = functools.partial(
        _fused_meta_splitting_kernel,
        layout=tuple((c, dp) for c, _d, dp in layout))

    out_pad = pl.pallas_call(
        kernel,
        out_shape=jax.ShapeDtypeStruct((b_pad, out_width), jnp.float32),
        in_specs=[pl.BlockSpec(memory_space=pltpu.MemorySpace.VMEM)] * len(flat),
        out_specs=pl.BlockSpec(memory_space=pltpu.MemorySpace.VMEM),
        compiler_params=pltpu.CompilerParams(vmem_limit_bytes=vmem_limit),
    )(*flat)
    # Slice padding back off outside the kernel (lane-dense store inside).
    return out_pad[:batch, :output_size]


def meta_splitting_reference(params, inputs, task_indices, *, operand_dtype=jnp.float32):
    """Pure-JAX reference mirroring the PyTorch forward.

    operand_dtype=jnp.bfloat16 mirrors the kernel's bf16 matmul operands
    (weights and activations rounded to bf16, f32 accumulation).
    """
    x = inputs.astype(jnp.float32)
    num_layers = len(params["weights"])
    for layer in range(num_layers):
        w = params["weights"][layer].astype(operand_dtype).astype(jnp.float32)
        b = params["biases"][layer].astype(jnp.float32)
        xc = x.astype(operand_dtype).astype(jnp.float32)
        copy_outputs = jnp.einsum("bi,cio->cbo", xc, w,
                                  precision=jax.lax.Precision.HIGHEST) + b
        if layer < num_layers - 1:
            copy_outputs = jnp.tanh(copy_outputs)
        alpha_sel = params["alpha"][layer][:, task_indices][:, :, None]
        x = jnp.sum(copy_outputs * alpha_sel, axis=0)
    return x


def init_params(key, input_size, hidden_size, output_size,
                num_copies_per_layer, num_test_tasks):
    """Deterministic synthetic weights standing in for the trained split_net."""
    num_layers = len(num_copies_per_layer)
    dims_in = [input_size] + [hidden_size] * (num_layers - 1)
    dims_out = [hidden_size] * (num_layers - 1) + [output_size]
    weights, biases, alphas = [], [], []
    for layer in range(num_layers):
        c = num_copies_per_layer[layer]
        key, kw, kb = jax.random.split(key, 3)
        scale = 1.0 / jnp.sqrt(jnp.float32(dims_in[layer]))
        weights.append(
            scale * jax.random.normal(kw, (c, dims_in[layer], dims_out[layer]),
                                      dtype=jnp.float32))
        biases.append(
            0.1 * jax.random.normal(kb, (c, 1, dims_out[layer]), dtype=jnp.float32))
        # alpha init exactly as in MetaSplittingNetwork.initialize_network:
        # 1/copies * ones(copies, num_test_tasks)
        alphas.append(jnp.full((c, num_test_tasks), 1.0 / c, dtype=jnp.float32))
    return {"weights": weights, "biases": biases, "alpha": alphas}


if __name__ == "__main__":
    # Small shapes consistent with the module (an MLP splitting network).
    batch = 8
    input_size = 16
    hidden_size = 32
    output_size = 8
    num_test_tasks = 4
    num_copies_per_layer = [2, 3, 2]      # copies per region/layer (from split_net)

    key = jax.random.PRNGKey(0)
    key, k_in, k_task = jax.random.split(key, 3)
    params = init_params(key, input_size, hidden_size, output_size,
                         num_copies_per_layer, num_test_tasks)

    inputs = jax.random.normal(k_in, (batch, input_size), dtype=jnp.float32)
    task_indices = jax.random.randint(k_task, (batch,), 0, num_test_tasks)

    # Pack once (init-time), reuse for every forward call.
    packed, meta = pack_params(params, weight_dtype=jnp.bfloat16)
    fwd = jax.jit(functools.partial(meta_splitting_forward, meta=meta))

    out = jax.block_until_ready(fwd(packed, inputs, task_indices))
    # Second call reuses the same packed params / compiled executable (no repacking).
    out = jax.block_until_ready(fwd(packed, inputs, task_indices))

    assert out.shape == (batch, output_size)
    # Tight check vs. a reference mirroring the kernel's bf16 operands.
    ref_bf16 = meta_splitting_reference(params, inputs, task_indices,
                                        operand_dtype=jnp.bfloat16)
    assert jnp.allclose(out, ref_bf16, atol=2e-3, rtol=2e-3), \
        "Pallas output mismatch vs bf16-operand reference"
    # Loose check vs. the exact f32 PyTorch-mirroring reference (bf16 operand noise).
    ref_f32 = meta_splitting_reference(params, inputs, task_indices)
    assert jnp.allclose(out, ref_f32, atol=5e-2, rtol=5e-2), \
        "Pallas output mismatch vs f32 reference"

    print("KERNEL_OK")
</pallas_src>

<mosaic_0001>
module attributes {stable_mosaic.version = 11 : i64} {
  func.func @_fused_meta_splitting_kernel(%arg0: memref<8x128xf32, #tpu.memory_space<vmem>>, %arg1: memref<8x896xf32, #tpu.memory_space<vmem>>, %arg2: memref<128x256xbf16, #tpu.memory_space<vmem>>, %arg3: memref<1x256xf32, #tpu.memory_space<vmem>>, %arg4: memref<128x384xbf16, #tpu.memory_space<vmem>>, %arg5: memref<1x384xf32, #tpu.memory_space<vmem>>, %arg6: memref<128x256xbf16, #tpu.memory_space<vmem>>, %arg7: memref<1x256xf32, #tpu.memory_space<vmem>>, %arg8: memref<8x128xf32, #tpu.memory_space<vmem>>) attributes {dimension_semantics = [], scalar_prefetch = 0 : i64, scratch_operands = 0 : i64, tpu.core_type = #tpu.core_type<tc>} {
    %c0 = arith.constant 0 : index
    %c0_0 = arith.constant 0 : index
    %0 = vector.load %arg0[%c0, %c0_0] : memref<8x128xf32, #tpu.memory_space<vmem>>, vector<8x128xf32>
    %c0_1 = arith.constant 0 : index
    %c0_2 = arith.constant 0 : index
    %1 = vector.load %arg1[%c0_1, %c0_2] : memref<8x896xf32, #tpu.memory_space<vmem>>, vector<8x896xf32>
    %2 = arith.truncf %0 : vector<8x128xf32> to vector<8x128xbf16>
    %c0_3 = arith.constant 0 : index
    %c0_4 = arith.constant 0 : index
    %3 = vector.load %arg2[%c0_3, %c0_4] : memref<128x256xbf16, #tpu.memory_space<vmem>>, vector<128x256xbf16>
    %cst = arith.constant dense<0.000000e+00> : vector<8x256xf32>
    %4 = tpu.matmul %2, %3, %cst {dimension_numbers = #tpu.dot_dimension_numbers<[1], [0], [0], [1], [0, 0, 1, 1], [], []>} : vector<8x128xbf16>, vector<128x256xbf16>, vector<8x256xf32> -> vector<8x256xf32>
    %c0_5 = arith.constant 0 : index
    %c0_6 = arith.constant 0 : index
    %5 = vector.load %arg3[%c0_5, %c0_6] : memref<1x256xf32, #tpu.memory_space<vmem>>, vector<1x256xf32>
    %6 = vector.broadcast %5 : vector<1x256xf32> to vector<8x256xf32>
    %7 = arith.addf %4, %6 : vector<8x256xf32>
    %8 = math.tanh %7 : vector<8x256xf32>
    %9 = vector.extract_strided_slice %1 {offsets = [0, 0], sizes = [8, 128], strides = [1, 1]} : vector<8x896xf32> to vector<8x128xf32>
    %10 = vector.extract_strided_slice %8 {offsets = [0, 0], sizes = [8, 128], strides = [1, 1]} : vector<8x256xf32> to vector<8x128xf32>
    %11 = arith.mulf %9, %10 : vector<8x128xf32>
    %12 = vector.extract_strided_slice %1 {offsets = [0, 128], sizes = [8, 128], strides = [1, 1]} : vector<8x896xf32> to vector<8x128xf32>
    %13 = vector.extract_strided_slice %8 {offsets = [0, 128], sizes = [8, 128], strides = [1, 1]} : vector<8x256xf32> to vector<8x128xf32>
    %14 = arith.mulf %12, %13 : vector<8x128xf32>
    %15 = arith.addf %11, %14 : vector<8x128xf32>
    %16 = arith.truncf %15 : vector<8x128xf32> to vector<8x128xbf16>
    %c0_7 = arith.constant 0 : index
    %c0_8 = arith.constant 0 : index
    %17 = vector.load %arg4[%c0_7, %c0_8] : memref<128x384xbf16, #tpu.memory_space<vmem>>, vector<128x384xbf16>
    %cst_9 = arith.constant dense<0.000000e+00> : vector<8x384xf32>
    %18 = tpu.matmul %16, %17, %cst_9 {dimension_numbers = #tpu.dot_dimension_numbers<[1], [0], [0], [1], [0, 0, 1, 1], [], []>} : vector<8x128xbf16>, vector<128x384xbf16>, vector<8x384xf32> -> vector<8x384xf32>
    %c0_10 = arith.constant 0 : index
    %c0_11 = arith.constant 0 : index
    %19 = vector.load %arg5[%c0_10, %c0_11] : memref<1x384xf32, #tpu.memory_space<vmem>>, vector<1x384xf32>
    %20 = vector.broadcast %19 : vector<1x384xf32> to vector<8x384xf32>
    %21 = arith.addf %18, %20 : vector<8x384xf32>
    %22 = math.tanh %21 : vector<8x384xf32>
    %23 = vector.extract_strided_slice %1 {offsets = [0, 256], sizes = [8, 128], strides = [1, 1]} : vector<8x896xf32> to vector<8x128xf32>
    %24 = vector.extract_strided_slice %22 {offsets = [0, 0], sizes = [8, 128], strides = [1, 1]} : vector<8x384xf32> to vector<8x128xf32>
    %25 = arith.mulf %23, %24 : vector<8x128xf32>
    %26 = vector.extract_strided_slice %1 {offsets = [0, 384], sizes = [8, 128], strides = [1, 1]} : vector<8x896xf32> to vector<8x128xf32>
    %27 = vector.extract_strided_slice %22 {offsets = [0, 128], sizes = [8, 128], strides = [1, 1]} : vector<8x384xf32> to vector<8x128xf32>
    %28 = arith.mulf %26, %27 : vector<8x128xf32>
    %29 = arith.addf %25, %28 : vector<8x128xf32>
    %30 = vector.extract_strided_slice %1 {offsets = [0, 512], sizes = [8, 128], strides = [1, 1]} : vector<8x896xf32> to vector<8x128xf32>
    %31 = vector.extract_strided_slice %22 {offsets = [0, 256], sizes = [8, 128], strides = [1, 1]} : vector<8x384xf32> to vector<8x128xf32>
    %32 = arith.mulf %30, %31 : vector<8x128xf32>
    %33 = arith.addf %29, %32 : vector<8x128xf32>
    %34 = arith.truncf %33 : vector<8x128xf32> to vector<8x128xbf16>
    %c0_12 = arith.constant 0 : index
    %c0_13 = arith.constant 0 : index
    %35 = vector.load %arg6[%c0_12, %c0_13] : memref<128x256xbf16, #tpu.memory_space<vmem>>, vector<128x256xbf16>
    %cst_14 = arith.constant dense<0.000000e+00> : vector<8x256xf32>
    %36 = tpu.matmul %34, %35, %cst_14 {dimension_numbers = #tpu.dot_dimension_numbers<[1], [0], [0], [1], [0, 0, 1, 1], [], []>} : vector<8x128xbf16>, vector<128x256xbf16>, vector<8x256xf32> -> vector<8x256xf32>
    %c0_15 = arith.constant 0 : index
    %c0_16 = arith.constant 0 : index
    %37 = vector.load %arg7[%c0_15, %c0_16] : memref<1x256xf32, #tpu.memory_space<vmem>>, vector<1x256xf32>
    %38 = vector.broadcast %37 : vector<1x256xf32> to vector<8x256xf32>
    %39 = arith.addf %36, %38 : vector<8x256xf32>
    %40 = vector.extract_strided_slice %1 {offsets = [0, 640], sizes = [8, 128], strides = [1, 1]} : vector<8x896xf32> to vector<8x128xf32>
    %41 = vector.extract_strided_slice %39 {offsets = [0, 0], sizes = [8, 128], strides = [1, 1]} : vector<8x256xf32> to vector<8x128xf32>
    %42 = arith.mulf %40, %41 : vector<8x128xf32>
    %43 = vector.extract_strided_slice %1 {offsets = [0, 768], sizes = [8, 128], strides = [1, 1]} : vector<8x896xf32> to vector<8x128xf32>
    %44 = vector.extract_strided_slice %39 {offsets = [0, 128], sizes = [8, 128], strides = [1, 1]} : vector<8x256xf32> to vector<8x128xf32>
    %45 = arith.mulf %43, %44 : vector<8x128xf32>
    %46 = arith.addf %42, %45 : vector<8x128xf32>
    %c0_17 = arith.constant 0 : index
    %c0_18 = arith.constant 0 : index
    %47 = vector.load %arg8[%c0_17, %c0_18] : memref<8x128xf32, #tpu.memory_space<vmem>>, vector<8x128xf32>
    tpu.vector_store %arg8[%c0_17, %c0_18], %46 {strides = array<i32>} : memref<8x128xf32, #tpu.memory_space<vmem>>, vector<8x128xf32>,
    return
  }
}

</mosaic_0001>

<llo_original>
// kernel: meta_splitting_forward.1
$region0: #{meta_splitting_forward.1}
  #allocation0 [shape = 'u32[]', space=smem, size = 0x4, offset = 0x4, fixed_abs, tag = 'smem constant byte address 0x4 - core index']
  #allocation1 [shape = 'u32[144,128]{1,0:T(1,128)}', space=vmem, size = 0x12000, scoped, tag = 'internal scratch']
  %s0 = inlined_call_operand.vmem [shape: f32[8,128], index: 0, kind: input, shape index: {}]
  %s1 = inlined_call_operand.vmem [shape: f32[8,896], index: 1, kind: input, shape index: {}]
  %s2 = inlined_call_operand.vmem [shape: bf16[128,256], index: 2, kind: input, shape index: {}]
  %s3 = inlined_call_operand.vmem [shape: f32[1,256], index: 3, kind: input, shape index: {}]
  %s4 = inlined_call_operand.vmem [shape: bf16[128,384], index: 4, kind: input, shape index: {}]
  %s5 = inlined_call_operand.vmem [shape: f32[1,384], index: 5, kind: input, shape index: {}]
  %s6 = inlined_call_operand.hbm [shape: bf16[128,256], index: 6, kind: input, shape index: {}]
  %s7 = inlined_call_operand.vmem [shape: f32[1,256], index: 7, kind: input, shape index: {}]
  %s8 = inlined_call_operand.hbm [shape: f32[8,128], index: 8, kind: output, shape index: {}]
  %s9 = sld [smem:[#allocation0]]
  $region46: #{meta_splitting_forward.1} parent=0
    _
  %s11 = ssub.s32 1, %s9
  %s12 = scalar_select 0, %s11, %s9
  $region1: #{meta_splitting_forward.1} parent=0
    #allocation2 [shape = 'u8[65536]{0}', space=vmem, size = 0x10000, scoped, tag = 'input window, operand 6, single buffered']
    #allocation3 [shape = 's32[1]{0}', space=sflag, size = 0x4, scoped, tag = 'scoped memory for meta_splitting_forward.1']
    #allocation4 [shape = 's32[1]{0}', space=sflag, size = 0x4, scoped, tag = 'scoped memory for meta_splitting_forward.1']
    #allocation5 [shape = 'u8[4096]{0}', space=vmem, size = 0x1000, scoped, tag = 'output window, operand 0, single buffered']
    %13 = vsyncpa [#allocation3], 0
    %14 = vsyncpa [#allocation4], 0
    // Predicated region
    $region2: #{meta_splitting_forward.1} parent=1 // pred_check
      _
    $region3: #{meta_splitting_forward.1} parent=1 // pred_check_branch
      %16 = sbr.rel (0) target = $region5
    $region4: #{meta_splitting_forward.1} parent=1 // pred_region
      _
    $region5: #{meta_splitting_forward.1} parent=1 // pred_fallthru
      _
    // Predicated region
    $region6: #{meta_splitting_forward.1} parent=1 // pred_check
      _
    $region7: #{meta_splitting_forward.1} parent=1 // pred_check_branch
      %18 = sbr.rel (0) target = $region9
    $region8: #{meta_splitting_forward.1} parent=1 // pred_region
      _
    $region9: #{meta_splitting_forward.1} parent=1 // pred_fallthru
      _
    // Predicated region
    $region10: #{meta_splitting_forward.1} parent=1 // pred_check
      _
    $region11: #{meta_splitting_forward.1} parent=1 // pred_check_branch
      %20 = sbr.rel (0) target = $region13
    $region12: #{meta_splitting_forward.1} parent=1 // pred_region
      _
    $region13: #{meta_splitting_forward.1} parent=1 // pred_fallthru
      _
    // Predicated region
    $region14: #{meta_splitting_forward.1} parent=1 // pred_check
      _
    $region15: #{meta_splitting_forward.1} parent=1 // pred_check_branch
      %22 = sbr.rel (0) target = $region17
    $region16: #{meta_splitting_forward.1} parent=1 // pred_region
      _
    $region17: #{meta_splitting_forward.1} parent=1 // pred_fallthru
      _
    // Predicated region
    $region18: #{meta_splitting_forward.1} parent=1 // pred_check
      _
    $region19: #{meta_splitting_forward.1} parent=1 // pred_check_branch
      %24 = sbr.rel (0) target = $region21
    $region20: #{meta_splitting_forward.1} parent=1 // pred_region
      _
    $region21: #{meta_splitting_forward.1} parent=1 // pred_fallthru
      _
    // Predicated region
    $region22: #{meta_splitting_forward.1} parent=1 // pred_check
      _
    $region23: #{meta_splitting_forward.1} parent=1 // pred_check_branch
      %26 = sbr.rel (0) target = $region25
    $region24: #{meta_splitting_forward.1} parent=1 // pred_region
      _
    $region25: #{meta_splitting_forward.1} parent=1 // pred_fallthru
      _
    // Predicated region
    $region26: #{meta_splitting_forward.1} parent=1 // pred_check
      _
    $region27: #{meta_splitting_forward.1} parent=1 // pred_check_branch
      %28 = sbr.rel (0) target = $region29
    $region28: #{meta_splitting_forward.1} parent=1 // pred_region
      %s30 = ssub.s32 2048, 2048
      %31 = vsyncadd [#allocation3], %s30
      %s32 = sshll.u32 [#allocation2], 4
      %s33 = int_to_ptr.vmem [resolvable:$true] %s32
      %38 = dma.hbm_to_vmem [thread:$0]  %s6, 2048, %s33, [#allocation3], 128, 128, 8
    $region29: #{meta_splitting_forward.1} parent=1 // pred_fallthru
      _
    // Predicated region
    $region30: #{meta_splitting_forward.1} parent=1 // pred_check
      _
    $region31: #{meta_splitting_forward.1} parent=1 // pred_check_branch
      %40 = sbr.rel (0) target = $region33
    $region32: #{meta_splitting_forward.1} parent=1 // pred_region
      _
    $region33: #{meta_splitting_forward.1} parent=1 // pred_fallthru
      _
    // Predicated region
    $region34: #{meta_splitting_forward.1} parent=1 // pred_check
      _
    $region35: #{meta_splitting_forward.1} parent=1 // pred_check_branch
      %42 = sbr.rel (0) target = $region37
    $region36: #{meta_splitting_forward.1} parent=1 // pred_region
      %43 = dma.done [#allocation3], 2048
    $region37: #{meta_splitting_forward.1} parent=1 // pred_fallthru
      _
    %v45 = vld [vmem:[%s0] sm:$0xff]
    %v46 = vld [vmem:[%s1] sm:$0xff]
    %v47 = vld [vmem:[%s1 + $0x8] sm:$0xff]
    %v48 = vld [vmem:[%s1 + $0x10] sm:$0xff]
    %v49 = vld [vmem:[%s1 + $0x18] sm:$0xff]
    %v50 = vld [vmem:[%s1 + $0x20] sm:$0xff]
    %v51 = vld [vmem:[%s1 + $0x28] sm:$0xff]
    %v52 = vld [vmem:[%s1 + $0x30] sm:$0xff]
    %v53 = vpack.c.bf16 %v45, %v45
    %v54 = vld [vmem:[%s2] sm:$0xff]
    %v55 = vld [vmem:[%s2 + $0x8] sm:$0xff]
    %v56 = vld [vmem:[%s2 + $0x10] sm:$0xff]
    %v57 = vld [vmem:[%s2 + $0x18] sm:$0xff]
    %v58 = vld [vmem:[%s2 + $0x20] sm:$0xff]
    %v59 = vld [vmem:[%s2 + $0x28] sm:$0xff]
    %v60 = vld [vmem:[%s2 + $0x30] sm:$0xff]
    %v61 = vld [vmem:[%s2 + $0x38] sm:$0xff]
    %v62 = vld [vmem:[%s2 + $0x40] sm:$0xff]
    %v63 = vld [vmem:[%s2 + $0x48] sm:$0xff]
    %v64 = vld [vmem:[%s2 + $0x50] sm:$0xff]
    %v65 = vld [vmem:[%s2 + $0x58] sm:$0xff]
    %v66 = vld [vmem:[%s2 + $0x60] sm:$0xff]
    %v67 = vld [vmem:[%s2 + $0x68] sm:$0xff]
    %v68 = vld [vmem:[%s2 + $0x70] sm:$0xff]
    %v69 = vld [vmem:[%s2 + $0x78] sm:$0xff]
    %v70 = vld [vmem:[%s3] sm:$0x3]
    %v72 = vlaneseq
    %v73 = vshrl.u32 %v72, 7
    %v74 = vsub.s32 0, %v73
    %v75 = vrot.slane %v70, %v74
    %v76 = vlaneseq
    %v77 = vshrl.u32 %v76, 7
    %v78 = vsub.s32 1, %v77
    %v79 = vrot.slane %v70, %v78
    %v98 = vunpack.c.l.b16 %v54
    %v99 = vunpack.c.h.b16 %v54
    %v100 = vunpack.c.l.b16 %v55
    %v101 = vunpack.c.h.b16 %v55
    %v102 = vunpack.c.l.b16 %v56
    %v103 = vunpack.c.h.b16 %v56
    %v104 = vunpack.c.l.b16 %v57
    %v105 = vunpack.c.h.b16 %v57
    %v106 = vunpack.c.l.b16 %v58
    %v107 = vunpack.c.h.b16 %v58
    %v108 = vunpack.c.l.b16 %v59
    %v109 = vunpack.c.h.b16 %v59
    %v110 = vunpack.c.l.b16 %v60
    %v111 = vunpack.c.h.b16 %v60
    %v112 = vunpack.c.l.b16 %v61
    %v113 = vunpack.c.h.b16 %v61
    %v114 = vunpack.c.l.b16 %v62
    %v115 = vunpack.c.h.b16 %v62
    %v116 = vunpack.c.l.b16 %v63
    %v117 = vunpack.c.h.b16 %v63
    %v118 = vunpack.c.l.b16 %v64
    %v119 = vunpack.c.h.b16 %v64
    %v120 = vunpack.c.l.b16 %v65
    %v121 = vunpack.c.h.b16 %v65
    %v122 = vunpack.c.l.b16 %v66
    %v123 = vunpack.c.h.b16 %v66
    %v124 = vunpack.c.l.b16 %v67
    %v125 = vunpack.c.h.b16 %v67
    %v126 = vunpack.c.l.b16 %v68
    %v127 = vunpack.c.h.b16 %v68
    %v128 = vunpack.c.l.b16 %v69
    %v129 = vunpack.c.h.b16 %v69
    %v130 = vpack.c.b16 %v100, %v98
    %v131 = vpack.c.b16 %v101, %v99
    %v132 = vpack.c.b16 %v104, %v102
    %v133 = vpack.c.b16 %v105, %v103
    %v134 = vpack.c.b16 %v108, %v106
    %v135 = vpack.c.b16 %v109, %v107
    %v136 = vpack.c.b16 %v112, %v110
    %v137 = vpack.c.b16 %v113, %v111
    %v138 = vpack.c.b16 %v116, %v114
    %v139 = vpack.c.b16 %v117, %v115
    %v140 = vpack.c.b16 %v120, %v118
    %v141 = vpack.c.b16 %v121, %v119
    %v142 = vpack.c.b16 %v124, %v122
    %v143 = vpack.c.b16 %v125, %v123
    %v144 = vpack.c.b16 %v128, %v126
    %v145 = vpack.c.b16 %v129, %v127
    %162 = vmatprep.subr.bf16.mxu0 %v131
    %163 = vmatpush1.bf16.msra.mxu0 %v130
    %164 = vmatprep.subr.bf16.mxu0 %v133
    %165 = vmatpush1.bf16.msra.mxu0 %v132
    %166 = vmatprep.subr.bf16.mxu0 %v135
    %167 = vmatpush1.bf16.msra.mxu0 %v134
    %168 = vmatprep.subr.bf16.mxu0 %v137
    %169 = vmatpush1.bf16.msra.mxu0 %v136
    %170 = vmatprep.subr.bf16.mxu0 %v139
    %171 = vmatpush1.bf16.msra.mxu0 %v138
    %172 = vmatprep.subr.bf16.mxu0 %v141
    %173 = vmatpush1.bf16.msra.mxu0 %v140
    %174 = vmatprep.subr.bf16.mxu0 %v143
    %175 = vmatpush1.bf16.msra.mxu0 %v142
    %176 = vmatprep.subr.bf16.mxu0 %v145
    %177 = vmatpush1.bf16.msra.mxu0 %v144
    %178 = vmatprep.subr.bf16.mxu0 0
    %179 = vmatpush1.bf16.msra.mxu0 0
    %180 = vmatprep.subr.bf16.mxu0 0
    %181 = vmatpush1.bf16.msra.mxu0 0
    %182 = vmatprep.subr.bf16.mxu0 0
    %183 = vmatpush1.bf16.msra.mxu0 0
    %184 = vmatprep.subr.bf16.mxu0 0
    %185 = vmatpush1.bf16.msra.mxu0 0
    %186 = vmatprep.subr.bf16.mxu0 0
    %187 = vmatpush1.bf16.msra.mxu0 0
    %188 = vmatprep.subr.bf16.mxu0 0
    %189 = vmatpush1.bf16.msra.mxu0 0
    %190 = vmatprep.subr.bf16.mxu0 0
    %191 = vmatpush1.bf16.msra.mxu0 0
    %192 = vmatprep.subr.bf16.mxu0 0
    %193 = vmatpush1.bf16.msra.mxu0 0
    %194 = vmatprep.mubr.bf16.mxu0 0
    %195 = vmatmul.mubr.bf16.gmra.mrb[0].mxu0 %v53
    %v196 = vpop.f32.mrb[0].mxu0
    %v197 = vadd.f32 %v75, %v196
    %v198 = vpop.f32.mrb[0].mxu0
    %v199 = vadd.f32 %v79, %v198
    %v200 = vpop.f32.mrb[0].mxu0
    %v201 = vpop.f32.mrb[0].mxu0
    %202 = vdwg.mxu0
    %v203 = vtanh.pop %v197
    %v204 = vtanh.pop %v199
    %v205 = vmul.f32 %v46, %v203
    %v206 = vmul.f32 %v47, %v204
    %v207 = vadd.f32 %v205, %v206
    %v208 = vpack.c.bf16 %v207, %v207
    %v209 = vld [vmem:[%s4] sm:$0xff]
    %v210 = vld [vmem:[%s4 + $0x8] sm:$0xf]
    %v211 = vld [vmem:[%s4 + $0xc] sm:$0xff]
    %v212 = vld [vmem:[%s4 + $0x14] sm:$0xf]
    %v213 = vld [vmem:[%s4 + $0x18] sm:$0xff]
    %v214 = vld [vmem:[%s4 + $0x20] sm:$0xf]
    %v215 = vld [vmem:[%s4 + $0x24] sm:$0xff]
    %v216 = vld [vmem:[%s4 + $0x2c] sm:$0xf]
    %v217 = vld [vmem:[%s4 + $0x30] sm:$0xff]
    %v218 = vld [vmem:[%s4 + $0x38] sm:$0xf]
    %v219 = vld [vmem:[%s4 + $0x3c] sm:$0xff]
    %v220 = vld [vmem:[%s4 + $0x44] sm:$0xf]
    %v221 = vld [vmem:[%s4 + $0x48] sm:$0xff]
    %v222 = vld [vmem:[%s4 + $0x50] sm:$0xf]
    %v223 = vld [vmem:[%s4 + $0x54] sm:$0xff]
    %v224 = vld [vmem:[%s4 + $0x5c] sm:$0xf]
    %v225 = vld [vmem:[%s4 + $0x60] sm:$0xff]
    %v226 = vld [vmem:[%s4 + $0x68] sm:$0xf]
    %v227 = vld [vmem:[%s4 + $0x6c] sm:$0xff]
    %v228 = vld [vmem:[%s4 + $0x74] sm:$0xf]
    %v229 = vld [vmem:[%s4 + $0x78] sm:$0xff]
    %v230 = vld [vmem:[%s4 + $0x80] sm:$0xf]
    %v231 = vld [vmem:[%s4 + $0x84] sm:$0xff]
    %v232 = vld [vmem:[%s4 + $0x8c] sm:$0xf]
    %v233 = vld [vmem:[%s4 + $0x90] sm:$0xff]
    %v234 = vld [vmem:[%s4 + $0x98] sm:$0xf]
    %v235 = vld [vmem:[%s4 + $0x9c] sm:$0xff]
    %v236 = vld [vmem:[%s4 + $0xa4] sm:$0xf]
    %v237 = vld [vmem:[%s4 + $0xa8] sm:$0xff]
    %v238 = vld [vmem:[%s4 + $0xb0] sm:$0xf]
    %v239 = vld [vmem:[%s4 + $0xb4] sm:$0xff]
    %v240 = vld [vmem:[%s4 + $0xbc] sm:$0xf]
    %v241 = vld [vmem:[%s5] sm:$0x7]
    %v243 = vlaneseq
    %v244 = vshrl.u32 %v243, 7
    %v245 = vsub.s32 0, %v244
    %v246 = vrot.slane %v241, %v245
    %v247 = vlaneseq
    %v248 = vshrl.u32 %v247, 7
    %v249 = vsub.s32 1, %v248
    %v250 = vrot.slane %v241, %v249
    %v251 = vlaneseq
    %v252 = vshrl.u32 %v251, 7
    %v253 = vsub.s32 2, %v252
    %v254 = vrot.slane %v241, %v253
    %v290 = vunpack.c.l.b16 %v209
    %v291 = vunpack.c.h.b16 %v209
    %v292 = vunpack.c.l.b16 %v210
    %v293 = vunpack.c.l.b16 %v211
    %v294 = vunpack.c.h.b16 %v211
    %v295 = vunpack.c.l.b16 %v212
    %v296 = vunpack.c.l.b16 %v213
    %v297 = vunpack.c.h.b16 %v213
    %v298 = vunpack.c.l.b16 %v214
    %v299 = vunpack.c.l.b16 %v215
    %v300 = vunpack.c.h.b16 %v215
    %v301 = vunpack.c.l.b16 %v216
    %v302 = vunpack.c.l.b16 %v217
    %v303 = vunpack.c.h.b16 %v217
    %v304 = vunpack.c.l.b16 %v218
    %v305 = vunpack.c.l.b16 %v219
    %v306 = vunpack.c.h.b16 %v219
    %v307 = vunpack.c.l.b16 %v220
    %v308 = vunpack.c.l.b16 %v221
    %v309 = vunpack.c.h.b16 %v221
    %v310 = vunpack.c.l.b16 %v222
    %v311 = vunpack.c.l.b16 %v223
    %v312 = vunpack.c.h.b16 %v223
    %v313 = vunpack.c.l.b16 %v224
    %v314 = vunpack.c.l.b16 %v225
    %v315 = vunpack.c.h.b16 %v225
    %v316 = vunpack.c.l.b16 %v226
    %v317 = vunpack.c.l.b16 %v227
    %v318 = vunpack.c.h.b16 %v227
    %v319 = vunpack.c.l.b16 %v228
    %v320 = vunpack.c.l.b16 %v229
    %v321 = vunpack.c.h.b16 %v229
    %v322 = vunpack.c.l.b16 %v230
    %v323 = vunpack.c.l.b16 %v231
    %v324 = vunpack.c.h.b16 %v231
    %v325 = vunpack.c.l.b16 %v232
    %v326 = vunpack.c.l.b16 %v233
    %v327 = vunpack.c.h.b16 %v233
    %v328 = vunpack.c.l.b16 %v234
    %v329 = vunpack.c.l.b16 %v235
    %v330 = vunpack.c.h.b16 %v235
    %v331 = vunpack.c.l.b16 %v236
    %v332 = vunpack.c.l.b16 %v237
    %v333 = vunpack.c.h.b16 %v237
    %v334 = vunpack.c.l.b16 %v238
    %v335 = vunpack.c.l.b16 %v239
    %v336 = vunpack.c.h.b16 %v239
    %v337 = vunpack.c.l.b16 %v240
    %v338 = vpack.c.b16 %v293, %v290
    %v339 = vpack.c.b16 %v294, %v291
    %v340 = vpack.c.b16 %v295, %v292
    %v341 = vpack.c.b16 %v299, %v296
    %v342 = vpack.c.b16 %v300, %v297
    %v343 = vpack.c.b16 %v301, %v298
    %v344 = vpack.c.b16 %v305, %v302
    %v345 = vpack.c.b16 %v306, %v303
    %v346 = vpack.c.b16 %v307, %v304
    %v347 = vpack.c.b16 %v311, %v308
    %v348 = vpack.c.b16 %v312, %v309
    %v349 = vpack.c.b16 %v313, %v310
    %v350 = vpack.c.b16 %v317, %v314
    %v351 = vpack.c.b16 %v318, %v315
    %v352 = vpack.c.b16 %v319, %v316
    %v353 = vpack.c.b16 %v323, %v320
    %v354 = vpack.c.b16 %v324, %v321
    %v355 = vpack.c.b16 %v325, %v322
    %v356 = vpack.c.b16 %v329, %v326
    %v357 = vpack.c.b16 %v330, %v327
    %v358 = vpack.c.b16 %v331, %v328
    %v359 = vpack.c.b16 %v335, %v332
    %v360 = vpack.c.b16 %v336, %v333
    %v361 = vpack.c.b16 %v337, %v334
    %386 = vmatprep.subr.bf16.mxu0 %v339
    %387 = vmatpush1.bf16.msra.mxu0 %v338
    %388 = vmatprep.subr.bf16.mxu0 %v342
    %389 = vmatpush1.bf16.msra.mxu0 %v341
    %390 = vmatprep.subr.bf16.mxu0 %v345
    %391 = vmatpush1.bf16.msra.mxu0 %v344
    %392 = vmatprep.subr.bf16.mxu0 %v348
    %393 = vmatpush1.bf16.msra.mxu0 %v347
    %394 = vmatprep.subr.bf16.mxu0 %v351
    %395 = vmatpush1.bf16.msra.mxu0 %v350
    %396 = vmatprep.subr.bf16.mxu0 %v354
    %397 = vmatpush1.bf16.msra.mxu0 %v353
    %398 = vmatprep.subr.bf16.mxu0 %v357
    %399 = vmatpush1.bf16.msra.mxu0 %v356
    %400 = vmatprep.subr.bf16.mxu0 %v360
    %401 = vmatpush1.bf16.msra.mxu0 %v359
    %402 = vmatprep.subr.bf16.mxu0 0
    %403 = vmatpush1.bf16.msra.mxu0 0
    %404 = vmatprep.subr.bf16.mxu0 0
    %405 = vmatpush1.bf16.msra.mxu0 0
    %406 = vmatprep.subr.bf16.mxu0 0
    %407 = vmatpush1.bf16.msra.mxu0 0
    %408 = vmatprep.subr.bf16.mxu0 0
    %409 = vmatpush1.bf16.msra.mxu0 0
    %410 = vmatprep.subr.bf16.mxu0 0
    %411 = vmatpush1.bf16.msra.mxu0 0
    %412 = vmatprep.subr.bf16.mxu0 0
    %413 = vmatpush1.bf16.msra.mxu0 0
    %414 = vmatprep.subr.bf16.mxu0 0
    %415 = vmatpush1.bf16.msra.mxu0 0
    %416 = vmatprep.subr.bf16.mxu0 0
    %417 = vmatpush1.bf16.msra.mxu0 0
    %418 = vmatprep.mubr.bf16.mxu0 0
    %419 = vmatmul.mubr.bf16.gmra.mrb[0].mxu0 %v208
    %v420 = vpop.f32.mrb[0].mxu0
    %v421 = vadd.f32 %v246, %v420
    %v422 = vpop.f32.mrb[0].mxu0
    %v423 = vadd.f32 %v250, %v422
    %v424 = vpop.f32.mrb[0].mxu0
    %v425 = vpop.f32.mrb[0].mxu0
    %426 = vdwg.mxu0
    %427 = vmatprep.subr.bf16.mxu0 0
    %428 = vmatpush1.bf16.msra.mxu0 %v340
    %429 = vmatprep.subr.bf16.mxu0 0
    %430 = vmatpush1.bf16.msra.mxu0 %v343
    %431 = vmatprep.subr.bf16.mxu0 0
    %432 = vmatpush1.bf16.msra.mxu0 %v346
    %433 = vmatprep.subr.bf16.mxu0 0
    %434 = vmatpush1.bf16.msra.mxu0 %v349
    %435 = vmatprep.subr.bf16.mxu0 0
    %436 = vmatpush1.bf16.msra.mxu0 %v352
    %437 = vmatprep.subr.bf16.mxu0 0
    %438 = vmatpush1.bf16.msra.mxu0 %v355
    %439 = vmatprep.subr.bf16.mxu0 0
    %440 = vmatpush1.bf16.msra.mxu0 %v358
    %441 = vmatprep.subr.bf16.mxu0 0
    %442 = vmatpush1.bf16.msra.mxu0 %v361
    %443 = vmatprep.subr.bf16.mxu0 0
    %444 = vmatpush1.bf16.msra.mxu0 0
    %445 = vmatprep.subr.bf16.mxu0 0
    %446 = vmatpush1.bf16.msra.mxu0 0
    %447 = vmatprep.subr.bf16.mxu0 0
    %448 = vmatpush1.bf16.msra.mxu0 0
    %449 = vmatprep.subr.bf16.mxu0 0
    %450 = vmatpush1.bf16.msra.mxu0 0
    %451 = vmatprep.subr.bf16.mxu0 0
    %452 = vmatpush1.bf16.msra.mxu0 0
    %453 = vmatprep.subr.bf16.mxu0 0
    %454 = vmatpush1.bf16.msra.mxu0 0
    %455 = vmatprep.subr.bf16.mxu0 0
    %456 = vmatpush1.bf16.msra.mxu0 0
    %457 = vmatprep.subr.bf16.mxu0 0
    %458 = vmatpush1.bf16.msra.mxu0 0
    %459 = vmatprep.mubr.bf16.mxu0 0
    %460 = vmatmul.mubr.bf16.gmra.mrb[0].mxu0 %v208
    %v461 = vpop.f32.mrb[0].mxu0
    %v462 = vadd.f32 %v254, %v461
    %v463 = vpop.f32.mrb[0].mxu0
    %v464 = vpop.f32.mrb[0].mxu0
    %v465 = vpop.f32.mrb[0].mxu0
    %466 = vdwg.mxu0
    %v467 = vtanh.pop %v421
    %v468 = vtanh.pop %v423
    %v469 = vtanh.pop %v462
    %v470 = vmul.f32 %v48, %v467
    %v471 = vmul.f32 %v49, %v468
    %v472 = vadd.f32 %v470, %v471
    %v473 = vmul.f32 %v50, %v469
    %v474 = vadd.f32 %v472, %v473
    %v475 = vpack.c.bf16 %v474, %v474
    %v476 = vld [vmem:[#allocation2] sm:$0xff]
    %v477 = vld [vmem:[#allocation2 + $0x8] sm:$0xff]
    %v478 = vld [vmem:[#allocation2 + $0x10] sm:$0xff]
    %v479 = vld [vmem:[#allocation2 + $0x18] sm:$0xff]
    %v480 = vld [vmem:[#allocation2 + $0x20] sm:$0xff]
    %v481 = vld [vmem:[#allocation2 + $0x28] sm:$0xff]
    %v482 = vld [vmem:[#allocation2 + $0x30] sm:$0xff]
    %v483 = vld [vmem:[#allocation2 + $0x38] sm:$0xff]
    %v484 = vld [vmem:[#allocation2 + $0x40] sm:$0xff]
    %v485 = vld [vmem:[#allocation2 + $0x48] sm:$0xff]
    %v486 = vld [vmem:[#allocation2 + $0x50] sm:$0xff]
    %v487 = vld [vmem:[#allocation2 + $0x58] sm:$0xff]
    %v488 = vld [vmem:[#allocation2 + $0x60] sm:$0xff]
    %v489 = vld [vmem:[#allocation2 + $0x68] sm:$0xff]
    %v490 = vld [vmem:[#allocation2 + $0x70] sm:$0xff]
    %v491 = vld [vmem:[#allocation2 + $0x78] sm:$0xff]
    %v492 = vld [vmem:[%s7] sm:$0x3]
    %v494 = vlaneseq
    %v495 = vshrl.u32 %v494, 7
    %v496 = vsub.s32 0, %v495
    %v497 = vrot.slane %v492, %v496
    %v498 = vlaneseq
    %v499 = vshrl.u32 %v498, 7
    %v500 = vsub.s32 1, %v499
    %v501 = vrot.slane %v492, %v500
    %v520 = vunpack.c.l.b16 %v476
    %v521 = vunpack.c.h.b16 %v476
    %v522 = vunpack.c.l.b16 %v477
    %v523 = vunpack.c.h.b16 %v477
    %v524 = vunpack.c.l.b16 %v478
    %v525 = vunpack.c.h.b16 %v478
    %v526 = vunpack.c.l.b16 %v479
    %v527 = vunpack.c.h.b16 %v479
    %v528 = vunpack.c.l.b16 %v480
    %v529 = vunpack.c.h.b16 %v480
    %v530 = vunpack.c.l.b16 %v481
    %v531 = vunpack.c.h.b16 %v481
    %v532 = vunpack.c.l.b16 %v482
    %v533 = vunpack.c.h.b16 %v482
    %v534 = vunpack.c.l.b16 %v483
    %v535 = vunpack.c.h.b16 %v483
    %v536 = vunpack.c.l.b16 %v484
    %v537 = vunpack.c.h.b16 %v484
    %v538 = vunpack.c.l.b16 %v485
    %v539 = vunpack.c.h.b16 %v485
    %v540 = vunpack.c.l.b16 %v486
    %v541 = vunpack.c.h.b16 %v486
    %v542 = vunpack.c.l.b16 %v487
    %v543 = vunpack.c.h.b16 %v487
    %v544 = vunpack.c.l.b16 %v488
    %v545 = vunpack.c.h.b16 %v488
    %v546 = vunpack.c.l.b16 %v489
    %v547 = vunpack.c.h.b16 %v489
    %v548 = vunpack.c.l.b16 %v490
    %v549 = vunpack.c.h.b16 %v490
    %v550 = vunpack.c.l.b16 %v491
    %v551 = vunpack.c.h.b16 %v491
    %v552 = vpack.c.b16 %v522, %v520
    %v553 = vpack.c.b16 %v523, %v521
    %v554 = vpack.c.b16 %v526, %v524
    %v555 = vpack.c.b16 %v527, %v525
    %v556 = vpack.c.b16 %v530, %v528
    %v557 = vpack.c.b16 %v531, %v529
    %v558 = vpack.c.b16 %v534, %v532
    %v559 = vpack.c.b16 %v535, %v533
    %v560 = vpack.c.b16 %v538, %v536
    %v561 = vpack.c.b16 %v539, %v537
    %v562 = vpack.c.b16 %v542, %v540
    %v563 = vpack.c.b16 %v543, %v541
    %v564 = vpack.c.b16 %v546, %v544
    %v565 = vpack.c.b16 %v547, %v545
    %v566 = vpack.c.b16 %v550, %v548
    %v567 = vpack.c.b16 %v551, %v549
    %584 = vmatprep.subr.bf16.mxu0 %v553
    %585 = vmatpush1.bf16.msra.mxu0 %v552
    %586 = vmatprep.subr.bf16.mxu0 %v555
    %587 = vmatpush1.bf16.msra.mxu0 %v554
    %588 = vmatprep.subr.bf16.mxu0 %v557
    %589 = vmatpush1.bf16.msra.mxu0 %v556
    %590 = vmatprep.subr.bf16.mxu0 %v559
    %591 = vmatpush1.bf16.msra.mxu0 %v558
    %592 = vmatprep.subr.bf16.mxu0 %v561
    %593 = vmatpush1.bf16.msra.mxu0 %v560
    %594 = vmatprep.subr.bf16.mxu0 %v563
    %595 = vmatpush1.bf16.msra.mxu0 %v562
    %596 = vmatprep.subr.bf16.mxu0 %v565
    %597 = vmatpush1.bf16.msra.mxu0 %v564
    %598 = vmatprep.subr.bf16.mxu0 %v567
    %599 = vmatpush1.bf16.msra.mxu0 %v566
    %600 = vmatprep.subr.bf16.mxu0 0
    %601 = vmatpush1.bf16.msra.mxu0 0
    %602 = vmatprep.subr.bf16.mxu0 0
    %603 = vmatpush1.bf16.msra.mxu0 0
    %604 = vmatprep.subr.bf16.mxu0 0
    %605 = vmatpush1.bf16.msra.mxu0 0
    %606 = vmatprep.subr.bf16.mxu0 0
    %607 = vmatpush1.bf16.msra.mxu0 0
    %608 = vmatprep.subr.bf16.mxu0 0
    %609 = vmatpush1.bf16.msra.mxu0 0
    %610 = vmatprep.subr.bf16.mxu0 0
    %611 = vmatpush1.bf16.msra.mxu0 0
    %612 = vmatprep.subr.bf16.mxu0 0
    %613 = vmatpush1.bf16.msra.mxu0 0
    %614 = vmatprep.subr.bf16.mxu0 0
    %615 = vmatpush1.bf16.msra.mxu0 0
    %616 = vmatprep.mubr.bf16.mxu0 0
    %617 = vmatmul.mubr.bf16.gmra.mrb[0].mxu0 %v475
    %v618 = vpop.f32.mrb[0].mxu0
    %v619 = vadd.f32 %v497, %v618
    %v620 = vpop.f32.mrb[0].mxu0
    %v621 = vadd.f32 %v501, %v620
    %v622 = vpop.f32.mrb[0].mxu0
    %v623 = vpop.f32.mrb[0].mxu0
    %624 = vdwg.mxu0
    %v625 = vmul.f32 %v51, %v619
    %v626 = vmul.f32 %v52, %v621
    %v627 = vadd.f32 %v625, %v626
    %628 = vst [vmem:[#allocation5] sm:$0xff] %v627
    // Predicated region
    $region38: #{meta_splitting_forward.1} parent=1 // pred_check
      _
    $region39: #{meta_splitting_forward.1} parent=1 // pred_check_branch
      %630 = sbr.rel (0) target = $region41
    $region40: #{meta_splitting_forward.1} parent=1 // pred_region
      %s632 = ssub.s32 128, 128
      %633 = vsyncadd [#allocation4], %s632
      %s635 = sshll.u32 [#allocation5], 4
      %s636 = int_to_ptr.vmem [resolvable:$true] %s635
      %638 = dma.vmem_to_hbm [thread:$0]  %s636, 128, %s8, [#allocation4]
    $region41: #{meta_splitting_forward.1} parent=1 // pred_fallthru
      _
    // Predicated region
    $region42: #{meta_splitting_forward.1} parent=1 // pred_check
      _
    $region43: #{meta_splitting_forward.1} parent=1 // pred_check_branch
      %640 = sbr.rel (0) target = $region45
    $region44: #{meta_splitting_forward.1} parent=1 // pred_region
      %641 = dma.done [#allocation4], 128
    $region45: #{meta_splitting_forward.1} parent=1 // pred_fallthru
      _
    %642 = vsyncpa [#allocation3], 1
    %643 = vsyncpa [#allocation4], 1

</llo_original>
